<compile_context>
chip_gen: v5e
topology: v5e:2x2
jax: 0.10.0
libtpu: 0.0.40
codegen_flags: <defaults>
</compile_context>

<pallas_src>
import math

import jax
import jax.numpy as jnp
from jax.experimental import pallas as pl
from jax.experimental.pallas import tpu as pltpu


def _relu_kernel(x_ref, o_ref):
    # Elementwise ReLU on the current VMEM tile (pure VPU work; the kernel is
    # HBM-bandwidth bound, so only layout/tiling matters).
    o_ref[...] = jnp.maximum(x_ref[...], jnp.zeros((), x_ref.dtype))


def _sublane_multiple(itemsize):
    # Sub-32-bit dtypes pack along sublanes: f32 -> 8, bf16 -> 16, int8 -> 32.
    return max(8, 32 // itemsize)


def _choose_2d_layout(total_elems, itemsize, fallback_cols):
    """Pick (cols, row_tile) for a lane-dense (rows, cols) view of the tensor.

    cols: a multiple of 128 that exactly divides the flat size (unmasked
    full-lane loads/stores). row_tile: a multiple of the dtype's sublane pack
    factor giving ~2 MiB blocks, preferring an even number of blocks >= 2
    (v7x megacore) and capping block bytes so double-buffered in+out tiles
    stay under v5e's 16 MiB default scoped-VMEM limit.
    """
    target = 2 << 20       # ~2 MiB per block: per-step overhead << HBM time
    max_block = 3 << 20    # 2 arrays x 2 buffers x 3 MiB = 12 MiB < 16 MiB (v5e)
    sub = _sublane_multiple(itemsize)

    col_cands = [c for c in (4096, 2048, 1024, 512, 256, 128)
                 if total_elems % c == 0]
    if not col_cands:
        # TODO(synk): non-128-divisible flat sizes keep the natural
        # trailing-dim view (masked lane stores); a padded/tail-block path
        # would recover full-lane stores for the bulk of the tensor.
        col_cands = [fallback_cols]

    best = None  # (score, cols, row_tile)
    for cols in col_cands:
        rows = total_elems // cols
        # Row-tile candidates: sublane-pack multiples that divide rows, plus
        # the whole-rows single block (always layout-legal: equals full dim).
        tile_cands = [d for d in range(sub, rows, sub) if rows % d == 0]
        tile_cands.append(rows)
        for rt in tile_cands:
            nblocks = rows // rt
            block_bytes = rt * cols * itemsize
            score = abs(block_bytes - target)
            if block_bytes > max_block:
                score += 1 << 40                      # VMEM safety
            if nblocks == 1:
                score += target // 2                  # leaves one v7x TC idle
            elif nblocks % 2 == 1:
                score += target // 2                  # odd split -> TC tail step
            if nblocks > 16:
                score += (nblocks - 16) * (1 << 18)   # per-step overhead
            if best is None or score < best[0]:
                best = (score, cols, rt)
    return best[1], best[2]


def relu_pallas(x_nchw, *, donate_input=False):
    """ReLU over an NCHW tensor, computed in a Pallas TPU kernel."""
    orig_shape = x_nchw.shape
    total = math.prod(orig_shape)
    itemsize = jnp.dtype(x_nchw.dtype).itemsize
    fallback_cols = (orig_shape[-1] * orig_shape[-2]
                     if len(orig_shape) >= 2 else total)

    cols, row_tile = _choose_2d_layout(total, itemsize, fallback_cols)
    rows = total // cols
    # Bitcast view for a contiguous row-major array (no HBM relayout copy).
    x2d = x_nchw.reshape(rows, cols)

    out2d = pl.pallas_call(
        _relu_kernel,
        out_shape=jax.ShapeDtypeStruct((rows, cols), x2d.dtype),
        grid=(rows // row_tile,),
        in_specs=[pl.BlockSpec((row_tile, cols), lambda i: (i, 0))],
        out_specs=pl.BlockSpec((row_tile, cols), lambda i: (i, 0)),
        compiler_params=pltpu.CompilerParams(
            dimension_semantics=("parallel",),
        ),
        cost_estimate=pl.CostEstimate(
            flops=total,
            transcendentals=0,
            bytes_accessed=2 * total * itemsize,
        ),
        # Matches nn.ReLU(inplace=True) when the caller can donate the buffer;
        # off by default so the input stays usable.
        input_output_aliases=({0: 0} if donate_input else {}),
    )(x2d)

    return out2d.reshape(orig_shape)


if __name__ == "__main__":
    key = jax.random.PRNGKey(0)
    k1, k2, k3 = jax.random.split(key, 3)

    relu_jit = jax.jit(relu_pallas)

    # Small shape consistent with the module's NCHW ReLU.
    x_small = jax.random.normal(k1, (2, 64, 16, 16), dtype=jnp.float32)
    y_small = relu_jit(x_small)
    jax.block_until_ready(y_small)
    assert y_small.shape == x_small.shape and y_small.dtype == x_small.dtype
    assert bool(jnp.all(y_small == jnp.maximum(x_small, 0.0)))

    # bf16 path exercises the dtype-aware sublane packing (16-row multiples).
    x_bf16 = jax.random.normal(k3, (2, 64, 16, 16), dtype=jnp.bfloat16)
    y_bf16 = jax.jit(relu_pallas)(x_bf16)
    jax.block_until_ready(y_bf16)
    assert y_bf16.shape == x_bf16.shape and y_bf16.dtype == x_bf16.dtype
    assert bool(jnp.all(y_bf16 == jnp.maximum(x_bf16, jnp.bfloat16(0))))

    # Original trace shape (3.2 MB) — exercises the lane-dense tiling path:
    # (784, 1024) slab, 2 even ~1.53 MiB blocks, one per v7x TensorCore.
    x_full = jax.random.normal(k2, (1, 1024, 28, 28), dtype=jnp.float32)
    y_full = relu_jit(x_full)
    jax.block_until_ready(y_full)
    assert y_full.shape == x_full.shape and y_full.dtype == x_full.dtype
    assert bool(jnp.all(y_full == jnp.maximum(x_full, 0.0)))

    print("KERNEL_OK")
</pallas_src>

<mosaic_0001>
module attributes {stable_mosaic.version = 11 : i64} {
  func.func @_relu_kernel(%arg0: i32, %arg1: memref<8x2048xf32, #tpu.memory_space<vmem>>, %arg2: memref<8x2048xf32, #tpu.memory_space<vmem>>) attributes {dimension_semantics = [#tpu.dimension_semantics<parallel>], iteration_bounds = array<i64: 2>, scalar_prefetch = 0 : i64, scratch_operands = 0 : i64, tpu.core_type = #tpu.core_type<tc>, window_params = [{transform_indices = @transform_0, window_bounds = array<i64: 8, 2048>}, {transform_indices = @transform_1, window_bounds = array<i64: 8, 2048>}]} {
    %c0 = arith.constant 0 : index
    %c0_0 = arith.constant 0 : index
    %0 = vector.load %arg1[%c0, %c0_0] : memref<8x2048xf32, #tpu.memory_space<vmem>>, vector<8x2048xf32>
    %cst = arith.constant 0.000000e+00 : f32
    %1 = vector.broadcast %cst : f32 to vector<8x2048xf32>
    %2 = arith.maximumf %0, %1 : vector<8x2048xf32>
    %c0_1 = arith.constant 0 : index
    %c0_2 = arith.constant 0 : index
    %3 = vector.load %arg2[%c0_1, %c0_2] : memref<8x2048xf32, #tpu.memory_space<vmem>>, vector<8x2048xf32>
    tpu.vector_store %arg2[%c0_1, %c0_2], %2 {strides = array<i32>} : memref<8x2048xf32, #tpu.memory_space<vmem>>, vector<8x2048xf32>,
    return
  }
  func.func @transform_0(%arg0: i32) -> (i32, i32) {
    %c0_i32 = arith.constant 0 : i32
    %c0_i32_0 = arith.constant 0 : i32
    return %arg0, %c0_i32 : i32, i32
  }
  func.func @transform_1(%arg0: i32) -> (i32, i32) {
    %c0_i32 = arith.constant 0 : i32
    %c0_i32_0 = arith.constant 0 : i32
    return %arg0, %c0_i32 : i32, i32
  }
}

</mosaic_0001>

<llo_original>
// kernel: relu_pallas.1
$region0: #{relu_pallas.1}
  #allocation0 [shape = 'u32[]', space=smem, size = 0x4, offset = 0x4, fixed_abs, tag = 'smem constant byte address 0x4 - core index']
  #allocation1 [shape = 'u32[72,128]{1,0:T(1,128)}', space=vmem, size = 0x9000, scoped, tag = 'internal scratch']
  %s0 = inlined_call_operand.vmem [shape: f32[16,2048], index: 0, kind: input, shape index: {}]
  %s1 = inlined_call_operand.vmem [shape: f32[16,2048], index: 1, kind: output, shape index: {}]
  %s2 = sld [smem:[#allocation0]]
  $region37: #{relu_pallas.1} parent=0
    _
  %s4 = ssub.s32 1, %s2
  %s5 = scalar_select 0, %s4, %s2
  loop: start=0, step=1, limit=4
  $region2: #{relu_pallas.1} parent=0 // loop_pre_header
    _
  $region3: #{relu_pallas.1} parent=0 // loop_header
    %s7 = sphi 0, %s11
    %p8 = scmp.ge.s32.totalorder %s7, 4
    %s17 = sphi 0, %s19
    %s20 = sphi 0, %s17
    %s21 = sphi 0, %s20
    %s37 = sphi 0, %s21
    %s43 = sphi 0, %s45
    %s46 = sphi 0, %s43
    %s47 = sphi 0, %s46
    %s63 = sphi 0, %s47
  $region4: #{relu_pallas.1} parent=0 // loop_header_branch
    %10 = sbr.rel (%p8) target = $region8
  $region5: #{relu_pallas.1} parent=0 // loop_body
    %s12 = ssub.s32 %s7, 1
    %s13 = ssub.s32 %s7, 2
    %s14 = sadd.s32 %s7, 1
    %s15 = ssub.s32 %s7, %s14
    %p16 = scmp.eq.s32.totalorder %s15, 0
    %s18 = sadd.s32 %s17, 1
    %s19 = scalar_select %p16, %s17, %s18
    %p22 = pneg %p16
    %p23 = scmp.eq.s32.totalorder %s7, 1
    %p24 = por %p22, %p23
    %p25 = scmp.ne.s32.totalorder %s17, %s20
    %p26 = scmp.eq.s32.totalorder %s7, 0
    %p27 = por %p25, %p26
    %p28 = scmp.ne.s32.totalorder %s17, %s20
    %p29 = scmp.eq.s32.totalorder %s12, 1
    %p30 = por %p28, %p29
    %p31 = scmp.ne.s32.totalorder %s20, %s21
    %p32 = scmp.eq.s32.totalorder %s12, 0
    %p33 = por %p31, %p32
    %p34 = scmp.ne.s32.totalorder %s20, %s21
    %p35 = scmp.eq.s32.totalorder %s13, 1
    %p36 = por %p34, %p35
    %p38 = scmp.ne.s32.totalorder %s21, %s37
    %p39 = scmp.eq.s32.totalorder %s13, 0
    %p40 = por %p38, %p39
    %s41 = ssub.s32 %s7, %s14
    %p42 = scmp.eq.s32.totalorder %s41, 0
    %s44 = sadd.s32 %s43, 1
    %s45 = scalar_select %p42, %s43, %s44
    %p48 = pneg %p42
    %p49 = scmp.eq.s32.totalorder %s7, 1
    %p50 = por %p48, %p49
    %p51 = scmp.ne.s32.totalorder %s43, %s46
    %p52 = scmp.eq.s32.totalorder %s7, 0
    %p53 = por %p51, %p52
    %p54 = scmp.ne.s32.totalorder %s43, %s46
    %p55 = scmp.eq.s32.totalorder %s12, 1
    %p56 = por %p54, %p55
    %p57 = scmp.ne.s32.totalorder %s46, %s47
    %p58 = scmp.eq.s32.totalorder %s12, 0
    %p59 = por %p57, %p58
    %p60 = scmp.ne.s32.totalorder %s46, %s47
    %p61 = scmp.eq.s32.totalorder %s13, 1
    %p62 = por %p60, %p61
    %p64 = scmp.ne.s32.totalorder %s47, %s63
    %p65 = scmp.eq.s32.totalorder %s13, 0
    %p66 = por %p64, %p65
    %p67 = scmp.le.s32.totalorder 1, %s7
    %p68 = scmp.lt.s32.totalorder %s7, 3
    %p69 = pnand %p67, %p68
    %p70 = pneg %p69
    // Predicated region
    $region9: #{relu_pallas.1} parent=5 // pred_check
      _
    $region10: #{relu_pallas.1} parent=5 // pred_check_branch
      %72 = sbr.rel (%p69) target = $region12
    $region11: #{relu_pallas.1} parent=5 // pred_region
      %s73 = ssub.s32 %s7, 1
    $region12: #{relu_pallas.1} parent=5 // pred_fallthru
      _
    %p74 = scmp.lt.s32.totalorder %s7, 2
    // Predicated region
    $region13: #{relu_pallas.1} parent=5 // pred_check
      %p75 = pneg %p74
    $region14: #{relu_pallas.1} parent=5 // pred_check_branch
      %77 = sbr.rel (%p75) target = $region16
    $region15: #{relu_pallas.1} parent=5 // pred_region
      // Predicated region
      $region17: #{relu_pallas.1} parent=15 // pred_check
        %p78 = pneg %p27
      $region18: #{relu_pallas.1} parent=15 // pred_check_branch
        %80 = sbr.rel (%p78) target = $region20
      $region19: #{relu_pallas.1} parent=15 // pred_region
        %p81 = scmp.lt.s32.totalorder %s7, 1
        %s82 = scalar_select %p81, %s7, 1
        %s83 = smul.addr %s82, 16
        %s84 = smul.addr %s83, 8
        %s85 = scalar_lea.vmem %s0, %s84
      $region20: #{relu_pallas.1} parent=15 // pred_fallthru
        _
    $region16: #{relu_pallas.1} parent=5 // pred_fallthru
      _
    %p86 = scmp.le.s32.totalorder 1, %s7
    %p87 = scmp.lt.s32.totalorder %s7, 3
    %p88 = pnand %p86, %p87
    %p89 = pneg %p88
    // Predicated region
    $region21: #{relu_pallas.1} parent=5 // pred_check
      _
    $region22: #{relu_pallas.1} parent=5 // pred_check_branch
      %91 = sbr.rel (%p88) target = $region24
    $region23: #{relu_pallas.1} parent=5 // pred_region
      %s92 = ssub.s32 %s7, 1
      %p93 = scmp.lt.s32.totalorder %s12, 1
      %s94 = scalar_select %p93, %s12, 1
      %s95 = smul.addr %s94, 16
      %s96 = smul.addr %s95, 8
      %s97 = scalar_lea.vmem %s0, %s96
      %p98 = pneg %p33
      %p99 = pneg %p30
      %p100 = pneg %p59
      %p101 = pneg %p56
      %p102 = scmp.lt.s32.totalorder %s12, 1
      %s103 = scalar_select %p102, %s12, 1
      %s104 = smul.addr %s103, 16
      %s105 = smul.addr %s104, 8
      %s106 = scalar_lea.vmem %s1, %s105
      %p107 = scmp.lt.s32.totalorder %s12, 1
      %s108 = scalar_select %p107, %s12, 1
      %s109 = smul.addr %s108, 16
      %s110 = smul.addr %s109, 8
      %s111 = scalar_lea.vmem %s0, %s110
      %p112 = scmp.lt.s32.totalorder %s12, 1
      %s113 = scalar_select %p112, %s12, 1
      %s114 = smul.addr %s113, 16
      %s115 = smul.addr %s114, 8
      %s116 = scalar_lea.vmem %s1, %s115
      %v117 = vld [vmem:[%s111] sm:$0xff]
      %v118 = vld [vmem:[%s111 + $0x8] sm:$0xff]
      %v119 = vld [vmem:[%s111 + $0x10] sm:$0xff]
      %v120 = vld [vmem:[%s111 + $0x18] sm:$0xff]
      %v121 = vld [vmem:[%s111 + $0x20] sm:$0xff]
      %v122 = vld [vmem:[%s111 + $0x28] sm:$0xff]
      %v123 = vld [vmem:[%s111 + $0x30] sm:$0xff]
      %v124 = vld [vmem:[%s111 + $0x38] sm:$0xff]
      %v125 = vld [vmem:[%s111 + $0x40] sm:$0xff]
      %v126 = vld [vmem:[%s111 + $0x48] sm:$0xff]
      %v127 = vld [vmem:[%s111 + $0x50] sm:$0xff]
      %v128 = vld [vmem:[%s111 + $0x58] sm:$0xff]
      %v129 = vld [vmem:[%s111 + $0x60] sm:$0xff]
      %v130 = vld [vmem:[%s111 + $0x68] sm:$0xff]
      %v131 = vld [vmem:[%s111 + $0x70] sm:$0xff]
      %v132 = vld [vmem:[%s111 + $0x78] sm:$0xff]
      %v133 = vmax.f32 %v117, 0.0
      %v134 = vmax.f32 %v118, 0.0
      %v135 = vmax.f32 %v119, 0.0
      %v136 = vmax.f32 %v120, 0.0
      %v137 = vmax.f32 %v121, 0.0
      %v138 = vmax.f32 %v122, 0.0
      %v139 = vmax.f32 %v123, 0.0
      %v140 = vmax.f32 %v124, 0.0
      %v141 = vmax.f32 %v125, 0.0
      %v142 = vmax.f32 %v126, 0.0
      %v143 = vmax.f32 %v127, 0.0
      %v144 = vmax.f32 %v128, 0.0
      %v145 = vmax.f32 %v129, 0.0
      %v146 = vmax.f32 %v130, 0.0
      %v147 = vmax.f32 %v131, 0.0
      %v148 = vmax.f32 %v132, 0.0
      %149 = vst [vmem:[%s116] sm:$0xff] %v133
      %150 = vst [vmem:[%s116 + $0x8] sm:$0xff] %v134
      %151 = vst [vmem:[%s116 + $0x10] sm:$0xff] %v135
      %152 = vst [vmem:[%s116 + $0x18] sm:$0xff] %v136
      %153 = vst [vmem:[%s116 + $0x20] sm:$0xff] %v137
      %154 = vst [vmem:[%s116 + $0x28] sm:$0xff] %v138
      %155 = vst [vmem:[%s116 + $0x30] sm:$0xff] %v139
      %156 = vst [vmem:[%s116 + $0x38] sm:$0xff] %v140
      %157 = vst [vmem:[%s116 + $0x40] sm:$0xff] %v141
      %158 = vst [vmem:[%s116 + $0x48] sm:$0xff] %v142
      %159 = vst [vmem:[%s116 + $0x50] sm:$0xff] %v143
      %160 = vst [vmem:[%s116 + $0x58] sm:$0xff] %v144
      %161 = vst [vmem:[%s116 + $0x60] sm:$0xff] %v145
      %162 = vst [vmem:[%s116 + $0x68] sm:$0xff] %v146
      %163 = vst [vmem:[%s116 + $0x70] sm:$0xff] %v147
      %164 = vst [vmem:[%s116 + $0x78] sm:$0xff] %v148
      %p165 = scmp.lt.s32.totalorder %s12, 1
      %s166 = scalar_select %p165, %s12, 1
      %s167 = smul.addr %s166, 16
      %s168 = smul.addr %s167, 8
      %s169 = scalar_lea.vmem %s1, %s168
      // Predicated region
      $region25: #{relu_pallas.1} parent=23 // pred_check
        %p170 = pneg %p56
      $region26: #{relu_pallas.1} parent=23 // pred_check_branch
        %172 = sbr.rel (%p170) target = $region28
      $region27: #{relu_pallas.1} parent=23 // pred_region
        _
      $region28: #{relu_pallas.1} parent=23 // pred_fallthru
        _
    $region24: #{relu_pallas.1} parent=5 // pred_fallthru
      _
    %p173 = scmp.le.s32.totalorder 2, %s7
    // Predicated region
    $region29: #{relu_pallas.1} parent=5 // pred_check
      %p174 = pneg %p173
    $region30: #{relu_pallas.1} parent=5 // pred_check_branch
      %176 = sbr.rel (%p174) target = $region32
    $region31: #{relu_pallas.1} parent=5 // pred_region
      %s177 = ssub.s32 %s7, 2
      // Predicated region
      $region33: #{relu_pallas.1} parent=31 // pred_check
        %p178 = pneg %p62
      $region34: #{relu_pallas.1} parent=31 // pred_check_branch
        %180 = sbr.rel (%p178) target = $region36
      $region35: #{relu_pallas.1} parent=31 // pred_region
        %p181 = scmp.lt.s32.totalorder %s13, 1
        %s182 = scalar_select %p181, %s13, 1
        %s183 = smul.addr %s182, 16
        %s184 = smul.addr %s183, 8
        %s185 = scalar_lea.vmem %s1, %s184
      $region36: #{relu_pallas.1} parent=31 // pred_fallthru
        _
    $region32: #{relu_pallas.1} parent=5 // pred_fallthru
      _
  $region6: #{relu_pallas.1} parent=0 // loop_footer
    %s11 = sadd.s32 1, %s7
  $region7: #{relu_pallas.1} parent=0 // loop_footer_branch
    %6 = sbr.rel target = $region3
  $region8: #{relu_pallas.1} parent=0 // loop_exit
    _

</llo_original>
